<compile_context>
chip_gen: v5e
topology: v5e:2x2
jax: 0.10.0
libtpu: 0.0.40
codegen_flags: <defaults>
</compile_context>

<pallas_src>
import jax
import jax.numpy as jnp
from jax.experimental import pallas as pl
from jax.experimental.pallas import tpu as pltpu


HIDDEN = 16  # fixed by the module definition (nn.Linear(num_channels, 16))


def _round_up(x, m):
    return m * ((x + m - 1) // m)


def _choose_block_b(B, desired):
    """Pick a lane-axis (batch) tile: multiple of 128, <= padded batch, and
    split into >= 2 grid steps when the batch is big enough (v7x has 2 TCs)."""
    Bp = _round_up(B, 128)
    block = min(_round_up(desired, 128), Bp)
    if Bp >= 2 * 128 and block >= Bp:
        # Whole batch fits one tile but we can afford two: split for megacore.
        block = max(128, _round_up(Bp // 2, 128))
    return block


def policy_kernel(x_ref, w1_ref, w2_ref, o_ref):
    """Fused linear -> sigmoid -> linear -> softmax, batch on the lane axis.

    x_ref  : [C,  TB]  f32   (inputs, feature-major: features x batch-tile)
    w1_ref : [16, C]   f32   (affine.weight, native PyTorch [out, in] layout)
    w2_ref : [A,  16]  f32   (controller.weight, native layout)
    o_ref  : [A,  TB]  f32   (softmax probs, feature-major)
    """
    x = x_ref[...]

    # affine (bias=False) -> dropout (identity in eval) -> sigmoid
    h = jnp.dot(w1_ref[...], x, preferred_element_type=jnp.float32)      # [16, TB]
    h = jax.nn.sigmoid(h)

    # controller (bias=False)
    logits = jnp.dot(w2_ref[...], h, preferred_element_type=jnp.float32)  # [A, TB]

    # Numerically stable softmax over the action (sublane) axis.
    m = jnp.max(logits, axis=0, keepdims=True)
    e = jnp.exp(logits - m)
    denom = jnp.sum(e, axis=0, keepdims=True)
    # Exact division: VPU slots are idle in this mem-bound kernel, and exact
    # normalization is required (approx reciprocal failed the sum-to-1 check).
    o_ref[...] = e / denom


def policy_forward_feature_major(x_t, w1, w2, *, block_b=64 * 1024):
    """Feature-major fast path (no transposes around the pallas_call).

    x_t: [C, B] f32; w1: [16, C]; w2: [A, 16]  ->  probs [A, B] f32.
    """
    C, B = x_t.shape
    A, h = w2.shape
    assert h == HIDDEN and w1.shape == (HIDDEN, C)

    block = _choose_block_b(B, block_b)
    Bp = _round_up(B, block)
    if Bp != B:
        x_t = jnp.pad(x_t, ((0, 0), (0, Bp - B)))          # lane-pad only

    grid = (Bp // block,)
    out_t = pl.pallas_call(
        policy_kernel,
        out_shape=jax.ShapeDtypeStruct((A, Bp), jnp.float32),
        grid=grid,
        in_specs=[
            pl.BlockSpec((C, block), lambda i: (0, i)),     # x tile (lane-dense)
            pl.BlockSpec((HIDDEN, C), lambda i: (0, 0)),    # W1, resident
            pl.BlockSpec((A, HIDDEN), lambda i: (0, 0)),    # W2, resident
        ],
        out_specs=pl.BlockSpec((A, block), lambda i: (0, i)),
        compiler_params=pltpu.CompilerParams(
            dimension_semantics=("parallel",),
            vmem_limit_bytes=32 * 1024 * 1024,
        ),
    )(x_t, w1, w2)

    return out_t[:, :B]                                     # [A, B]


def policy_forward(x, w1, w2, *, block_b=64 * 1024):
    """PyTorch-layout wrapper: x [B, C] -> probs [B, A].

    The transposes here are pure layout plumbing for API compatibility; callers
    that can keep activations feature-major should use
    `policy_forward_feature_major` and skip both full-array copies.
    """
    return policy_forward_feature_major(x.T, w1, w2, block_b=block_b).T


def init_params(key, num_channels, num_actions):
    """Deterministic init mimicking nn.Linear default U[-1/sqrt(fan_in), +].

    Weights kept in native PyTorch layout: [out_features, in_features]."""
    k1, k2 = jax.random.split(key)
    b1 = 1.0 / jnp.sqrt(jnp.float32(num_channels))
    b2 = 1.0 / jnp.sqrt(jnp.float32(HIDDEN))
    w1 = jax.random.uniform(k1, (HIDDEN, num_channels),
                            minval=-b1, maxval=b1, dtype=jnp.float32)
    w2 = jax.random.uniform(k2, (num_actions, HIDDEN),
                            minval=-b2, maxval=b2, dtype=jnp.float32)
    return w1, w2


def _reference(x, w1, w2):
    # Eval-mode dropout == identity.
    return jax.nn.softmax(jax.nn.sigmoid(x @ w1.T) @ w2.T, axis=-1)


if __name__ == "__main__":
    key = jax.random.PRNGKey(0)
    kx, kp, kx2 = jax.random.split(key, 3)

    B, num_channels, num_actions = 8, 4, 6
    x = jax.random.normal(kx, (B, num_channels), dtype=jnp.float32)
    w1, w2 = init_params(kp, num_channels, num_actions)

    out = jax.block_until_ready(policy_forward(x, w1, w2))
    ref = _reference(x, w1, w2)
    assert out.shape == (B, num_actions)
    assert jnp.allclose(out, ref, atol=1e-5, rtol=1e-5)
    assert jnp.allclose(jnp.sum(out, axis=-1), 1.0, atol=1e-5)

    # Second check: non-multiple-of-128 batch; block chooser splits it into
    # grid=2 (pipelined, megacore-shardable path).
    B2 = 300
    x2 = jax.random.normal(kx2, (B2, num_channels), dtype=jnp.float32)
    out2 = jax.block_until_ready(policy_forward(x2, w1, w2))
    ref2 = _reference(x2, w1, w2)
    assert out2.shape == (B2, num_actions)
    assert jnp.allclose(out2, ref2, atol=1e-5, rtol=1e-5)
    assert jnp.allclose(jnp.sum(out2, axis=-1), 1.0, atol=1e-5)

    # Feature-major fast path (no wrapper transposes).
    out3 = jax.block_until_ready(policy_forward_feature_major(x2.T, w1, w2))
    assert jnp.allclose(out3.T, ref2, atol=1e-5, rtol=1e-5)

    print("KERNEL_OK")
</pallas_src>

<mosaic_0001>
module attributes {stable_mosaic.version = 11 : i64} {
  func.func @policy_kernel(%arg0: i32, %arg1: memref<4x128xf32, #tpu.memory_space<vmem>>, %arg2: memref<16x4xf32, #tpu.memory_space<vmem>>, %arg3: memref<6x16xf32, #tpu.memory_space<vmem>>, %arg4: memref<6x128xf32, #tpu.memory_space<vmem>>) attributes {dimension_semantics = [#tpu.dimension_semantics<parallel>], iteration_bounds = array<i64: 1>, scalar_prefetch = 0 : i64, scratch_operands = 0 : i64, tpu.core_type = #tpu.core_type<tc>, window_params = [{transform_indices = @transform_0, window_bounds = array<i64: 4, 128>}, {pipeline_mode = #tpu.pipeline_mode<synchronous>, transform_indices = @transform_1, window_bounds = array<i64: 16, 4>}, {pipeline_mode = #tpu.pipeline_mode<synchronous>, transform_indices = @transform_2, window_bounds = array<i64: 6, 16>}, {transform_indices = @transform_3, window_bounds = array<i64: 6, 128>}]} {
    %c0 = arith.constant 0 : index
    %c0_0 = arith.constant 0 : index
    %0 = vector.load %arg1[%c0, %c0_0] : memref<4x128xf32, #tpu.memory_space<vmem>>, vector<4x128xf32>
    %c0_1 = arith.constant 0 : index
    %c0_2 = arith.constant 0 : index
    %1 = vector.load %arg2[%c0_1, %c0_2] : memref<16x4xf32, #tpu.memory_space<vmem>>, vector<16x4xf32>
    %cst = arith.constant dense<0.000000e+00> : vector<16x128xf32>
    %2 = tpu.matmul %1, %0, %cst {dimension_numbers = #tpu.dot_dimension_numbers<[1], [0], [0], [1], [0, 0, 1, 1], [], []>} : vector<16x4xf32>, vector<4x128xf32>, vector<16x128xf32> -> vector<16x128xf32>
    %3 = arith.negf %2 : vector<16x128xf32>
    %4 = math.exp %3 : vector<16x128xf32>
    %cst_3 = arith.constant 1.000000e+00 : f32
    %5 = vector.broadcast %cst_3 : f32 to vector<16x128xf32>
    %6 = arith.addf %5, %4 : vector<16x128xf32>
    %7 = arith.divf %5, %6 : vector<16x128xf32>
    %c0_4 = arith.constant 0 : index
    %c0_5 = arith.constant 0 : index
    %8 = vector.load %arg3[%c0_4, %c0_5] : memref<6x16xf32, #tpu.memory_space<vmem>>, vector<6x16xf32>
    %cst_6 = arith.constant dense<0.000000e+00> : vector<6x128xf32>
    %9 = tpu.matmul %8, %7, %cst_6 {dimension_numbers = #tpu.dot_dimension_numbers<[1], [0], [0], [1], [0, 0, 1, 1], [], []>} : vector<6x16xf32>, vector<16x128xf32>, vector<6x128xf32> -> vector<6x128xf32>
    %cst_7 = arith.constant dense<0xFF800000> : vector<128xf32>
    %10 = vector.multi_reduction <maximumf>, %9, %cst_7 [0] : vector<6x128xf32> to vector<128xf32>
    %11 = vector.shape_cast %10 : vector<128xf32> to vector<1x128xf32>
    %12 = vector.broadcast %11 : vector<1x128xf32> to vector<6x128xf32>
    %13 = arith.subf %9, %12 : vector<6x128xf32>
    %14 = math.exp %13 : vector<6x128xf32>
    %cst_8 = arith.constant dense<0.000000e+00> : vector<128xf32>
    %15 = vector.multi_reduction <add>, %14, %cst_8 [0] : vector<6x128xf32> to vector<128xf32>
    %16 = vector.shape_cast %15 : vector<128xf32> to vector<1x128xf32>
    %17 = vector.broadcast %16 : vector<1x128xf32> to vector<6x128xf32>
    %18 = arith.divf %14, %17 : vector<6x128xf32>
    %c0_9 = arith.constant 0 : index
    %c0_10 = arith.constant 0 : index
    %19 = vector.load %arg4[%c0_9, %c0_10] : memref<6x128xf32, #tpu.memory_space<vmem>>, vector<6x128xf32>
    tpu.vector_store %arg4[%c0_9, %c0_10], %18 {strides = array<i32>} : memref<6x128xf32, #tpu.memory_space<vmem>>, vector<6x128xf32>,
    return
  }
  func.func @transform_0(%arg0: i32) -> (i32, i32) {
    %c0_i32 = arith.constant 0 : i32
    %c0_i32_0 = arith.constant 0 : i32
    return %c0_i32, %arg0 : i32, i32
  }
  func.func @transform_1(%arg0: i32) -> (i32, i32) {
    %c0_i32 = arith.constant 0 : i32
    %c0_i32_0 = arith.constant 0 : i32
    %c0_i32_1 = arith.constant 0 : i32
    return %c0_i32, %c0_i32_0 : i32, i32
  }
  func.func @transform_2(%arg0: i32) -> (i32, i32) {
    %c0_i32 = arith.constant 0 : i32
    %c0_i32_0 = arith.constant 0 : i32
    %c0_i32_1 = arith.constant 0 : i32
    return %c0_i32, %c0_i32_0 : i32, i32
  }
  func.func @transform_3(%arg0: i32) -> (i32, i32) {
    %c0_i32 = arith.constant 0 : i32
    %c0_i32_0 = arith.constant 0 : i32
    return %c0_i32, %arg0 : i32, i32
  }
}

</mosaic_0001>

<llo_original>
// kernel: tpu_custom_call.1
$region0: #{tpu_custom_call.1}
  #allocation0 [shape = 'u32[]', space=smem, size = 0x4, offset = 0x4, fixed_abs, tag = 'smem constant byte address 0x4 - core index']
  #allocation1 [shape = 'u32[72,128]{1,0:T(1,128)}', space=vmem, size = 0x9000, scoped, tag = 'internal scratch']
  %s0 = inlined_call_operand.vmem [shape: f32[4,128], index: 0, kind: input, shape index: {}]
  %s1 = inlined_call_operand.vmem [shape: f32[16,4], index: 1, kind: input, shape index: {}]
  %s2 = inlined_call_operand.vmem [shape: f32[6,16], index: 2, kind: input, shape index: {}]
  %s3 = inlined_call_operand.hbm [shape: f32[6,128], index: 3, kind: output, shape index: {}]
  %s4 = sld [smem:[#allocation0]]
  $region22: #{tpu_custom_call.1} parent=0
    _
  %s6 = ssub.s32 1, %s4
  %s7 = scalar_select 0, %s6, %s4
  $region1: #{tpu_custom_call.1} parent=0
    #allocation2 [shape = 'u8[4096]{0}', space=vmem, size = 0x1000, scoped, tag = 'output window, operand 0, single buffered']
    #allocation3 [shape = 's32[1]{0}', space=sflag, size = 0x4, scoped, tag = 'scoped memory for tpu_custom_call.1']
    %8 = vsyncpa [#allocation3], 0
    // Predicated region
    $region2: #{tpu_custom_call.1} parent=1 // pred_check
      _
    $region3: #{tpu_custom_call.1} parent=1 // pred_check_branch
      %10 = sbr.rel (0) target = $region5
    $region4: #{tpu_custom_call.1} parent=1 // pred_region
      _
    $region5: #{tpu_custom_call.1} parent=1 // pred_fallthru
      _
    // Predicated region
    $region6: #{tpu_custom_call.1} parent=1 // pred_check
      _
    $region7: #{tpu_custom_call.1} parent=1 // pred_check_branch
      %12 = sbr.rel (0) target = $region9
    $region8: #{tpu_custom_call.1} parent=1 // pred_region
      _
    $region9: #{tpu_custom_call.1} parent=1 // pred_fallthru
      _
    // Predicated region
    $region10: #{tpu_custom_call.1} parent=1 // pred_check
      _
    $region11: #{tpu_custom_call.1} parent=1 // pred_check_branch
      %14 = sbr.rel (0) target = $region13
    $region12: #{tpu_custom_call.1} parent=1 // pred_region
      _
    $region13: #{tpu_custom_call.1} parent=1 // pred_fallthru
      _
    %v15 = vld [vmem:[%s0] sm:$0xf]
    %v16 = vld [vmem:[%s1] sm:$0xff]
    %v17 = vld [vmem:[%s1 + $0x8] sm:$0xff]
    %vm18 = vcmask 31744
    %v20 = vsel %vm18, %v16, 0
    %v23 = vsel %vm18, %v17, 0
    %vm25 = vcmask 1043456
    %v27 = vsel %vm25, %v15, 0
    %29 = vmatpush.msra.mxu0 0.0
    %30 = vmatpush.msra.mxu0 0.0
    %31 = vmatpush.msra.mxu0 0.0
    %32 = vmatpush.msra.mxu0 0.0
    %33 = vmatpush.msra.mxu0 0.0
    %34 = vmatpush.msra.mxu0 0.0
    %35 = vmatpush.msra.mxu0 0.0
    %36 = vmatpush.msra.mxu0 0.0
    %37 = vmatpush.msra.mxu0 0.0
    %38 = vmatpush.msra.mxu0 0.0
    %39 = vmatpush.msra.mxu0 0.0
    %40 = vmatpush.msra.mxu0 0.0
    %41 = vmatpush.msra.mxu0 0.0
    %42 = vmatpush.msra.mxu0 0.0
    %43 = vmatpush.msra.mxu0 0.0
    %44 = vmatpush.msra.mxu0 %v27
    %45 = vmatmul.f32.gmra.mxu0 %v20
    %v46 = vpop.f32.mrf.mxu0
    %v47 = vadd.f32 0.0, %v46
    %48 = vmatmul.f32.gmra.mxu0 %v23
    %v49 = vpop.f32.mrf.mxu0
    %v50 = vadd.f32 0.0, %v49
    %51 = vdwg.mxu0
    %v52 = vxor.u32 %v47, 2147483648
    %v53 = vxor.u32 %v50, 2147483648
    %v54 = vmul.f32 %v52, 1.442695
    %v55 = vpow.pop %v54
    %v56 = vmul.f32 %v53, 1.442695
    %v57 = vpow.pop %v56
    %v58 = vadd.f32 %v55, 1.0
    %v59 = vadd.f32 %v57, 1.0
    %v60 = vrcp.pop %v58
    %v61 = vmul.f32 %v58, %v60
    %v62 = vsub.f32 1.0, %v61
    %v63 = vmul.f32 %v60, %v62
    %v64 = vadd.f32 %v60, %v63
    %vm65 = vweird.f32 %v58
    %vm66 = vweird.f32 %v60
    %vm67 = vmor %vm65, %vm66
    %v68 = vsel %vm67, %v60, %v64
    %v69 = vand.u32 2147483647, %v58
    %vm70 = vcmp.eq.f32.partialorder %v69, 8.507059e+37
    %v71 = vand.u32 %v58, 2147483648
    %v72 = vor.u32 1.1754944e-38, %v71
    %v73 = vsel %vm70, %v72, %v68
    %v74 = vmul.f32 1.0, %v73
    %v75 = vrcp.pop %v59
    %v76 = vmul.f32 %v59, %v75
    %v77 = vsub.f32 1.0, %v76
    %v78 = vmul.f32 %v75, %v77
    %v79 = vadd.f32 %v75, %v78
    %vm80 = vweird.f32 %v59
    %vm81 = vweird.f32 %v75
    %vm82 = vmor %vm80, %vm81
    %v83 = vsel %vm82, %v75, %v79
    %v84 = vand.u32 2147483647, %v59
    %vm85 = vcmp.eq.f32.partialorder %v84, 8.507059e+37
    %v86 = vand.u32 %v59, 2147483648
    %v87 = vor.u32 1.1754944e-38, %v86
    %v88 = vsel %vm85, %v87, %v83
    %v89 = vmul.f32 1.0, %v88
    %v90 = vld [vmem:[%s2] sm:$0x3f]
    %vm91 = vcmask 130048
    %v93 = vsel %vm91, %v90, 0
    %95 = vmatpush.msra.mxu0 0.0
    %96 = vmatpush.msra.mxu0 0.0
    %97 = vmatpush.msra.mxu0 0.0
    %98 = vmatpush.msra.mxu0 0.0
    %99 = vmatpush.msra.mxu0 0.0
    %100 = vmatpush.msra.mxu0 0.0
    %101 = vmatpush.msra.mxu0 0.0
    %102 = vmatpush.msra.mxu0 0.0
    %103 = vmatpush.msra.mxu0 0.0
    %104 = vmatpush.msra.mxu0 0.0
    %105 = vmatpush.msra.mxu0 0.0
    %106 = vmatpush.msra.mxu0 0.0
    %107 = vmatpush.msra.mxu0 0.0
    %108 = vmatpush.msra.mxu0 0.0
    %109 = vmatpush.msra.mxu0 %v89
    %110 = vmatpush.msra.mxu0 %v74
    %111 = vmatmul.f32.gmra.mxu0 %v93
    %v112 = vpop.f32.mrf.mxu0
    %v113 = vadd.f32 0.0, %v112
    %114 = vdwg.mxu0
    %vm115 = vcmask 1045504
    %v116 = vsel %vm115, %v113, -inf
    %v117 = vrot.slane %v116, 4
    %v118 = vmax.f32 %v116, %v117
    %v119 = vrot.slane %v118, 2
    %v120 = vmax.f32 %v118, %v119
    %v121 = vrot.slane %v120, 1
    %v122 = vmax.f32 %v120, %v121
    %v123 = vsub.f32 %v113, %v122
    %v124 = vmul.f32 %v123, 1.442695
    %v125 = vpow.pop %v124
    %v126 = vsel %vm115, %v125, 0.0
    %v127 = vrot.slane %v126, 4
    %v128 = vadd.f32 %v126, %v127
    %v129 = vrot.slane %v128, 2
    %v130 = vadd.f32 %v128, %v129
    %v131 = vrot.slane %v130, 1
    %v132 = vadd.f32 %v130, %v131
    %v133 = vrcp.pop %v132
    %v134 = vmul.f32 %v132, %v133
    %v135 = vsub.f32 1.0, %v134
    %v136 = vmul.f32 %v133, %v135
    %v137 = vadd.f32 %v133, %v136
    %vm138 = vweird.f32 %v132
    %vm139 = vweird.f32 %v133
    %vm140 = vmor %vm138, %vm139
    %v141 = vsel %vm140, %v133, %v137
    %v142 = vand.u32 2147483647, %v132
    %vm143 = vcmp.eq.f32.partialorder %v142, 8.507059e+37
    %v144 = vand.u32 %v132, 2147483648
    %v145 = vor.u32 1.1754944e-38, %v144
    %v146 = vsel %vm143, %v145, %v141
    %v147 = vmul.f32 %v125, %v146
    %148 = vst [vmem:[#allocation2] sm:$0x3f] %v147
    // Predicated region
    $region14: #{tpu_custom_call.1} parent=1 // pred_check
      _
    $region15: #{tpu_custom_call.1} parent=1 // pred_check_branch
      %150 = sbr.rel (0) target = $region17
    $region16: #{tpu_custom_call.1} parent=1 // pred_region
      %152 = vsyncadd [#allocation3], 0
      %s154 = sshll.u32 [#allocation2], 4
      %s155 = int_to_ptr.vmem [resolvable:$true] %s154
      %s156 = sshll.u32 %s3, 4
      %s157 = int_to_ptr.hbm [resolvable:$true] %s156
      %159 = dma.vmem_to_hbm [thread:$0]  %s155, 128, %s157, [#allocation3]
    $region17: #{tpu_custom_call.1} parent=1 // pred_fallthru
      _
    // Predicated region
    $region18: #{tpu_custom_call.1} parent=1 // pred_check
      _
    $region19: #{tpu_custom_call.1} parent=1 // pred_check_branch
      %161 = sbr.rel (0) target = $region21
    $region20: #{tpu_custom_call.1} parent=1 // pred_region
      %163 = dma.done [#allocation3], 128
    $region21: #{tpu_custom_call.1} parent=1 // pred_fallthru
      _
    %164 = vsyncpa [#allocation3], 1

</llo_original>
